<compile_context>
chip_gen: v7x
topology: tpu7x:2x2x1
jax: 0.10.0
libtpu: 0.0.40
codegen_flags: <defaults>
</compile_context>

<pallas_src>
import functools

import jax
import jax.numpy as jnp
from jax.experimental import pallas as pl
from jax.experimental.pallas import tpu as pltpu


def _se_kernel(x_ref, w1t_ref, w2t_ref, o_ref):
    """One grid step processes a (Bt, C, HW) slab of samples.

    x_ref : (Bt, C, HW)  activations, HW on the lane axis (lane-dense)
    w1t   : (C, Cr)      fc1 weight, pre-transposed, f32
    w2t   : (Cr, C)      fc2 weight, pre-transposed, f32
    o_ref : (Bt, C, HW)
    """
    inv_hw = jnp.float32(1.0 / x_ref.shape[-1])

    # Global average pool = lane-axis reduce with f32 accumulation.  Only the
    # tiny pooled vector is f32; no f32 copy of the full slab is materialized.
    pooled = jnp.sum(x_ref[...], axis=-1, dtype=jnp.float32) * inv_hw      # (Bt, C)

    # fc1 (1x1 conv, no bias) + ReLU.
    h = jnp.dot(pooled, w1t_ref[...], preferred_element_type=jnp.float32)  # (Bt, Cr)
    h = jnp.maximum(h, 0.0)

    # fc2 (1x1 conv, no bias) + sigmoid.
    s = jnp.dot(h, w2t_ref[...], preferred_element_type=jnp.float32)       # (Bt, C)
    s = jax.nn.sigmoid(s)

    # Rescale: per-(sample, channel) scale broadcast along the lane (HW) axis.
    scale = s.astype(o_ref.dtype)[:, :, None]                              # (Bt, C, 1)
    o_ref[...] = (x_ref[...] * scale).astype(o_ref.dtype)


def _round_up(x, m):
    return ((x + m - 1) // m) * m


def _tpu_hw_params():
    """Generation-aware knobs: (vmem_capacity_bytes, cores_per_chip, block_target_bytes)."""
    vmem_cap = 128 << 20          # v5e / v6e physical VMEM per TensorCore
    kind = ""
    try:
        info = pltpu.get_tpu_info()
        vmem_cap = int(getattr(info, "vmem_capacity_bytes", vmem_cap))
    except Exception:
        pass
    try:
        kind = jax.devices()[0].device_kind.lower()
    except Exception:
        pass
    # v7x: 2 TensorCores / chip, 64 MiB VMEM per TC.  v5e/v6e: 1 TC, 128 MiB.
    is_v7 = ("v7" in kind) or (vmem_cap <= (64 << 20))
    cores = 2 if is_v7 else 1
    # HBM-roofline kernel: big blocks amortize the ~0.35us per-grid-step cost.
    # 4 MiB blocks on v7x (4 x 4 MiB double-buffered << 64 MiB), 8 MiB on v5e/v6e.
    block_target = (4 << 20) if is_v7 else (8 << 20)
    return vmem_cap, cores, block_target


def _pick_batch_tile(batch, sample_bytes, *, target_bytes, num_cores, sublane_mult):
    """Pick Bt = a divisor of `batch`.

    Priorities: (1) block fits `target_bytes`; (2) on multi-core chips the step
    count batch//Bt is a multiple of the core count (balanced megacore split);
    (3) biggest block, with a small bonus for sublane-aligned Bt.
    Only exact divisors are considered: prime/awkward batches degrade to Bt=1
    (correct, just more grid steps).
    """
    divisors = [d for d in range(1, batch + 1) if batch % d == 0]
    fitting = [d for d in divisors if d * sample_bytes <= target_bytes] or [1]

    def rank(d):
        steps = batch // d
        balanced = (num_cores == 1) or (steps % num_cores == 0)
        aligned = (d % sublane_mult == 0) or (d == batch)
        # Block size is the dominant lever (HBM roofline); alignment of the
        # (Bt, C) pooled/scale vectors is minor, so it only breaks near-ties.
        return (balanced, d * (1.0 if aligned else 0.75), d)

    return max(fitting, key=rank)


@functools.partial(jax.jit, donate_argnums=(0,))
def se_module_pallas(x_nchw, w1, w2):
    """SEModule forward.  x_nchw: (B, C, H, W); w1: (Cr, C); w2: (C, Cr).

    x_nchw is donated and rescaled in place via input_output_aliases; callers
    must not reuse the input buffer after this call.
    """
    B, C, H, W = x_nchw.shape
    Cr = w1.shape[0]
    HW = H * W
    itemsize = jnp.dtype(x_nchw.dtype).itemsize
    sublane_mult = max(8, 32 // itemsize)        # 8 (f32) / 16 (bf16) / 32 (8-bit)

    vmem_cap, num_cores, block_target = _tpu_hw_params()

    # (B, C, H, W) -> (B, C, HW): free metadata reshape, HW on the lane axis.
    x_bc_hw = x_nchw.reshape(B, C, HW)
    # Tiny weights: transpose + pre-cast to f32 in the wrapper (no per-step vcvt).
    w1t = jnp.transpose(w1).astype(jnp.float32)   # (C, Cr)
    w2t = jnp.transpose(w2).astype(jnp.float32)   # (Cr, C)

    sample_bytes = C * HW * itemsize
    Bt = _pick_batch_tile(B, sample_bytes, target_bytes=block_target,
                          num_cores=num_cores, sublane_mult=sublane_mult)

    # VMEM footprint of one x / o block, including sublane / lane padding
    # (C pads to the sublane multiple, HW pads to a multiple of 128 lanes).
    block_vmem = Bt * _round_up(C, sublane_mult) * _round_up(HW, 128) * itemsize
    # f32 weights, 2 pipeline buffers per spec, padded layout.
    w_vmem = 2 * 4 * (_round_up(C, 8) * _round_up(Cr, 128)
                      + _round_up(Cr, 8) * _round_up(C, 128))
    slack = 2 << 20                               # compiler scratch, sems, etc.
    max_limit = max(vmem_cap - (8 << 20), 16 << 20)   # headroom below physical VMEM

    # Default: double-buffered in + out blocks (full DMA/compute overlap).  If a
    # single huge sample cannot fit that way, fall back to single-buffered x/o
    # blocks: same one-pass, 2x-HBM-bytes algorithm, partially exposed DMA.
    need_double = 4 * block_vmem + w_vmem + slack
    single_buffer_x = need_double > max_limit
    vmem_need = (2 * block_vmem if single_buffer_x else 4 * block_vmem) + w_vmem + slack
    vmem_limit = int(min(max(vmem_need, 32 << 20), max_limit))
    # TODO(synk): if even the single-buffered block exceeds VMEM (per-sample slab
    # > ~25 MiB on v7x), add an HW-tiled two-phase variant (pass 1: accumulate
    # pooled sums into VMEM scratch; pass 2: re-stream tiles and apply the scale).
    # TODO(synk): for HW < 128 (7x7 / 14x14 maps) repack (C, HW) lane-dense so
    # v7x stores aren't masked vst.msk; on v5e/v6e the HBM roofline hides this.

    def x_block_spec():
        idx = lambda b: (b, 0, 0)
        if single_buffer_x:
            return pl.BlockSpec((Bt, C, HW), idx, pipeline_mode=pl.Buffered(1))
        return pl.BlockSpec((Bt, C, HW), idx)

    out = pl.pallas_call(
        _se_kernel,
        out_shape=jax.ShapeDtypeStruct((B, C, HW), x_nchw.dtype),
        grid_spec=pltpu.PrefetchScalarGridSpec(
            num_scalar_prefetch=0,
            grid=(B // Bt,),
            in_specs=[
                x_block_spec(),                              # x slab
                pl.BlockSpec((C, Cr), lambda b: (0, 0)),     # w1^T (full, resident)
                pl.BlockSpec((Cr, C), lambda b: (0, 0)),     # w2^T (full, resident)
            ],
            out_specs=x_block_spec(),
        ),
        # Write the result in place over the input HBM buffer.
        input_output_aliases={0: 0},
        compiler_params=pltpu.CompilerParams(
            dimension_semantics=("parallel",),
            vmem_limit_bytes=vmem_limit),
    )(x_bc_hw, w1t, w2t)

    # Free metadata reshape back to NCHW.
    return out.reshape(B, C, H, W)


def se_module_ref(x_nchw, w1, w2):
    """Plain-JAX reference matching the PyTorch forward exactly."""
    pooled = jnp.mean(x_nchw, axis=(2, 3))                     # (B, C)
    h = jnp.maximum(pooled @ w1.T, 0.0)                        # (B, Cr)
    s = jax.nn.sigmoid(h @ w2.T)                               # (B, C)
    return x_nchw * s[:, :, None, None]


if __name__ == "__main__":
    B, C, H, W = 2, 4, 16, 16
    reduction = 2
    Cr = C // reduction

    key = jax.random.PRNGKey(0)
    kx, k1, k2 = jax.random.split(key, 3)
    x = jax.random.normal(kx, (B, C, H, W), dtype=jnp.float32)
    # Conv2d(channels, channels//reduction, k=1, bias=False) weight: (Cr, C)
    w1 = jax.random.normal(k1, (Cr, C), dtype=jnp.float32) * 0.1
    # Conv2d(channels//reduction, channels, k=1, bias=False) weight: (C, Cr)
    w2 = jax.random.normal(k2, (C, Cr), dtype=jnp.float32) * 0.1

    # Compute the reference first: x's buffer is donated to the Pallas call
    # (in-place rescale), so it must not be read afterwards.
    ref = jax.block_until_ready(se_module_ref(x, w1, w2))

    out = jax.block_until_ready(se_module_pallas(x, w1, w2))

    assert out.shape == (B, C, H, W)
    assert jnp.allclose(out, ref, atol=1e-5, rtol=1e-5), "mismatch vs reference"
    print("KERNEL_OK")
</pallas_src>

<mosaic_0001>
module attributes {stable_mosaic.version = 11 : i64} {
  func.func @_se_kernel(%arg0: i32, %arg1: memref<2x4x256xf32, #tpu.memory_space<vmem>>, %arg2: memref<4x2xf32, #tpu.memory_space<vmem>>, %arg3: memref<2x4xf32, #tpu.memory_space<vmem>>, %arg4: memref<2x4x256xf32, #tpu.memory_space<vmem>>) attributes {dimension_semantics = [#tpu.dimension_semantics<parallel>], iteration_bounds = array<i64: 1>, scalar_prefetch = 0 : i64, scratch_operands = 0 : i64, tpu.core_type = #tpu.core_type<tc>, window_params = [{transform_indices = @transform_0, window_bounds = array<i64: 2, 4, 256>}, {pipeline_mode = #tpu.pipeline_mode<synchronous>, transform_indices = @transform_1, window_bounds = array<i64: 4, 2>}, {pipeline_mode = #tpu.pipeline_mode<synchronous>, transform_indices = @transform_2, window_bounds = array<i64: 2, 4>}, {transform_indices = @transform_3, window_bounds = array<i64: 2, 4, 256>}]} {
    %c0 = arith.constant 0 : index
    %c0_0 = arith.constant 0 : index
    %c0_1 = arith.constant 0 : index
    %0 = vector.load %arg1[%c0, %c0_0, %c0_1] : memref<2x4x256xf32, #tpu.memory_space<vmem>>, vector<2x4x256xf32>
    %cst = arith.constant dense<0.000000e+00> : vector<2x4xf32>
    %1 = vector.multi_reduction <add>, %0, %cst [2] : vector<2x4x256xf32> to vector<2x4xf32>
    %cst_2 = arith.constant 3.906250e-03 : f32
    %2 = vector.broadcast %cst_2 : f32 to vector<2x4xf32>
    %3 = arith.mulf %1, %2 : vector<2x4xf32>
    %c0_3 = arith.constant 0 : index
    %c0_4 = arith.constant 0 : index
    %4 = vector.load %arg2[%c0_3, %c0_4] : memref<4x2xf32, #tpu.memory_space<vmem>>, vector<4x2xf32>
    %cst_5 = arith.constant dense<0.000000e+00> : vector<2x2xf32>
    %5 = tpu.matmul %3, %4, %cst_5 {dimension_numbers = #tpu.dot_dimension_numbers<[1], [0], [0], [1], [0, 0, 1, 1], [], []>} : vector<2x4xf32>, vector<4x2xf32>, vector<2x2xf32> -> vector<2x2xf32>
    %cst_6 = arith.constant 0.000000e+00 : f32
    %6 = vector.broadcast %cst_6 : f32 to vector<2x2xf32>
    %7 = arith.maximumf %5, %6 : vector<2x2xf32>
    %c0_7 = arith.constant 0 : index
    %c0_8 = arith.constant 0 : index
    %8 = vector.load %arg3[%c0_7, %c0_8] : memref<2x4xf32, #tpu.memory_space<vmem>>, vector<2x4xf32>
    %cst_9 = arith.constant dense<0.000000e+00> : vector<2x4xf32>
    %9 = tpu.matmul %7, %8, %cst_9 {dimension_numbers = #tpu.dot_dimension_numbers<[1], [0], [0], [1], [0, 0, 1, 1], [], []>} : vector<2x2xf32>, vector<2x4xf32>, vector<2x4xf32> -> vector<2x4xf32>
    %10 = arith.negf %9 : vector<2x4xf32>
    %11 = math.exp %10 : vector<2x4xf32>
    %cst_10 = arith.constant 1.000000e+00 : f32
    %12 = vector.broadcast %cst_10 : f32 to vector<2x4xf32>
    %13 = arith.addf %12, %11 : vector<2x4xf32>
    %14 = arith.divf %12, %13 : vector<2x4xf32>
    %15 = vector.shape_cast %14 : vector<2x4xf32> to vector<2x4x1xf32>
    %c0_11 = arith.constant 0 : index
    %c0_12 = arith.constant 0 : index
    %c0_13 = arith.constant 0 : index
    %16 = vector.load %arg1[%c0_11, %c0_12, %c0_13] : memref<2x4x256xf32, #tpu.memory_space<vmem>>, vector<2x4x256xf32>
    %17 = vector.broadcast %15 : vector<2x4x1xf32> to vector<2x4x256xf32>
    %18 = arith.mulf %16, %17 : vector<2x4x256xf32>
    %c0_14 = arith.constant 0 : index
    %c0_15 = arith.constant 0 : index
    %c0_16 = arith.constant 0 : index
    %19 = vector.load %arg4[%c0_14, %c0_15, %c0_16] : memref<2x4x256xf32, #tpu.memory_space<vmem>>, vector<2x4x256xf32>
    tpu.vector_store %arg4[%c0_14, %c0_15, %c0_16], %18 {strides = array<i32>} : memref<2x4x256xf32, #tpu.memory_space<vmem>>, vector<2x4x256xf32>,
    return
  }
  func.func @transform_0(%arg0: i32) -> (i32, i32, i32) {
    %c0_i32 = arith.constant 0 : i32
    %c0_i32_0 = arith.constant 0 : i32
    %c0_i32_1 = arith.constant 0 : i32
    return %arg0, %c0_i32, %c0_i32_0 : i32, i32, i32
  }
  func.func @transform_1(%arg0: i32) -> (i32, i32) {
    %c0_i32 = arith.constant 0 : i32
    %c0_i32_0 = arith.constant 0 : i32
    %c0_i32_1 = arith.constant 0 : i32
    return %c0_i32, %c0_i32_0 : i32, i32
  }
  func.func @transform_2(%arg0: i32) -> (i32, i32) {
    %c0_i32 = arith.constant 0 : i32
    %c0_i32_0 = arith.constant 0 : i32
    %c0_i32_1 = arith.constant 0 : i32
    return %c0_i32, %c0_i32_0 : i32, i32
  }
  func.func @transform_3(%arg0: i32) -> (i32, i32, i32) {
    %c0_i32 = arith.constant 0 : i32
    %c0_i32_0 = arith.constant 0 : i32
    %c0_i32_1 = arith.constant 0 : i32
    return %arg0, %c0_i32, %c0_i32_0 : i32, i32, i32
  }
}

</mosaic_0001>

<llo_original>
// kernel: se_module_pallas.1
$region0: #{se_module_pallas.1}
  #allocation0 [shape = 'u32[]', space=smem, size = 0x4, offset = 0x4, fixed_abs, tag = 'smem constant byte address 0x4 - core index']
  #allocation1 [shape = 'u32[144,128]{1,0:T(1,128)}', space=vmem, size = 0x12000, scoped, tag = 'internal scratch']
  %s0 = inlined_call_operand.vmem [shape: f32[2,4,256], index: 0, kind: input, shape index: {}, may-alias: {0,3}]
  %s1 = inlined_call_operand.vmem [shape: f32[4,2], index: 1, kind: input, shape index: {}]
  %s2 = inlined_call_operand.vmem [shape: f32[2,4], index: 2, kind: input, shape index: {}]
  %s3 = inlined_call_operand.vmem [shape: f32[2,4,256], index: 3, kind: output, shape index: {}, may-alias: {0,3}]
  %s4 = sld [smem:[#allocation0]]
  $region22: #{se_module_pallas.1} parent=0
    _
  %s6 = ssub.s32 1, %s4
  %s7 = scalar_select 0, %s6, %s4
  // Predicated region
  $region2: #{se_module_pallas.1} parent=0 // pred_check
    _
  $region3: #{se_module_pallas.1} parent=0 // pred_check_branch
    %9 = sbr.rel (0) target = $region5
  $region4: #{se_module_pallas.1} parent=0 // pred_region
    _
  $region5: #{se_module_pallas.1} parent=0 // pred_fallthru
    _
  // Predicated region
  $region6: #{se_module_pallas.1} parent=0 // pred_check
    _
  $region7: #{se_module_pallas.1} parent=0 // pred_check_branch
    %11 = sbr.rel (0) target = $region9
  $region8: #{se_module_pallas.1} parent=0 // pred_region
    _
  $region9: #{se_module_pallas.1} parent=0 // pred_fallthru
    _
  // Predicated region
  $region10: #{se_module_pallas.1} parent=0 // pred_check
    _
  $region11: #{se_module_pallas.1} parent=0 // pred_check_branch
    %13 = sbr.rel (0) target = $region13
  $region12: #{se_module_pallas.1} parent=0 // pred_region
    _
  $region13: #{se_module_pallas.1} parent=0 // pred_fallthru
    _
  %v14 = vld [vmem:[%s0] sm:$0xff]
  %v15 = vld [vmem:[%s0 + $0x8] sm:$0xff]
  %v18 = vcombine.high %v14, %v14
  %v19 = vcombine.high %v15, %v15
  %vm22 = vcmask 1043456
  %v23 = vsel %vm22, %v14, 0.0
  %v24 = vsel %vm22, %v18, 0.0
  %v25 = vadd.f32 %v23, %v24
  %26 = vadd.xlane.f32.xlu0 %v25
  %v27 = vpop.xlane.xlu0 %26
  %v28 = vsel %vm22, %v15, 0.0
  %v29 = vsel %vm22, %v19, 0.0
  %v30 = vadd.f32 %v28, %v29
  %31 = vadd.xlane.f32.xlu0 %v30
  %v32 = vpop.xlane.xlu0 %31
  %v33 = vmul.f32 %v27, 0.00390625
  %v34 = vmul.f32 %v32, 0.00390625
  %v35 = vld [vmem:[%s1] sm:$0xf]
  %v38 = vlaneseq
  %v39 = vand.u32 %v38, 127
  %v40 = vlaneseq
  %v41 = vshrl.u32 %v40, 7
  %v42 = vsub.s32 %v39, %v41
  %v43 = vrot.slane %v33, %v42
  %v44 = vlaneseq
  %v45 = vshrl.u32 %v44, 7
  %v46 = vsub.s32 %v39, %v45
  %v47 = vrot.slane %v34, %v46
  %vm48 = vcmask 1041409
  %v49 = vsel %vm48, %v47, %v43
  %vm50 = vcmask 31744
  %v51 = vsel %vm50, %v49, 0
  %v54 = vsel %vm22, %v35, 0
  %56 = vmatprep.subr.mxu0 0.0
  %57 = vmatpush1.msra.mxu0 %v54
  %58 = vmatprep.subr.mxu0 0.0
  %59 = vmatpush1.msra.mxu0 0.0
  %60 = vmatprep.subr.mxu0 0.0
  %61 = vmatpush1.msra.mxu0 0.0
  %62 = vmatprep.subr.mxu0 0.0
  %63 = vmatpush1.msra.mxu0 0.0
  %64 = vmatprep.subr.mxu0 0.0
  %65 = vmatpush1.msra.mxu0 0.0
  %66 = vmatprep.subr.mxu0 0.0
  %67 = vmatpush1.msra.mxu0 0.0
  %68 = vmatprep.subr.mxu0 0.0
  %69 = vmatpush1.msra.mxu0 0.0
  %70 = vmatprep.subr.mxu0 0.0
  %71 = vmatpush1.msra.mxu0 0.0
  %72 = vmatprep.subr.mxu0 0.0
  %73 = vmatpush1.msra.mxu0 0.0
  %74 = vmatprep.subr.mxu0 0.0
  %75 = vmatpush1.msra.mxu0 0.0
  %76 = vmatprep.subr.mxu0 0.0
  %77 = vmatpush1.msra.mxu0 0.0
  %78 = vmatprep.subr.mxu0 0.0
  %79 = vmatpush1.msra.mxu0 0.0
  %80 = vmatprep.subr.mxu0 0.0
  %81 = vmatpush1.msra.mxu0 0.0
  %82 = vmatprep.subr.mxu0 0.0
  %83 = vmatpush1.msra.mxu0 0.0
  %84 = vmatprep.subr.mxu0 0.0
  %85 = vmatpush1.msra.mxu0 0.0
  %86 = vmatprep.subr.mxu0 0.0
  %87 = vmatpush1.msra.mxu0 0.0
  %88 = vmatprep.subr.mxu0 0.0
  %89 = vmatpush1.msra.mxu0 0.0
  %90 = vmatprep.subr.mxu0 0.0
  %91 = vmatpush1.msra.mxu0 0.0
  %92 = vmatprep.subr.mxu0 0.0
  %93 = vmatpush1.msra.mxu0 0.0
  %94 = vmatprep.subr.mxu0 0.0
  %95 = vmatpush1.msra.mxu0 0.0
  %96 = vmatprep.subr.mxu0 0.0
  %97 = vmatpush1.msra.mxu0 0.0
  %98 = vmatprep.subr.mxu0 0.0
  %99 = vmatpush1.msra.mxu0 0.0
  %100 = vmatprep.subr.mxu0 0.0
  %101 = vmatpush1.msra.mxu0 0.0
  %102 = vmatprep.subr.mxu0 0.0
  %103 = vmatpush1.msra.mxu0 0.0
  %104 = vmatprep.subr.mxu0 0.0
  %105 = vmatpush1.msra.mxu0 0.0
  %106 = vmatprep.subr.mxu0 0.0
  %107 = vmatpush1.msra.mxu0 0.0
  %108 = vmatprep.subr.mxu0 0.0
  %109 = vmatpush1.msra.mxu0 0.0
  %110 = vmatprep.subr.mxu0 0.0
  %111 = vmatpush1.msra.mxu0 0.0
  %112 = vmatprep.subr.mxu0 0.0
  %113 = vmatpush1.msra.mxu0 0.0
  %114 = vmatprep.subr.mxu0 0.0
  %115 = vmatpush1.msra.mxu0 0.0
  %116 = vmatprep.subr.mxu0 0.0
  %117 = vmatpush1.msra.mxu0 0.0
  %118 = vmatprep.subr.mxu0 0.0
  %119 = vmatpush1.msra.mxu0 0.0
  %120 = vmatprep.mubr.f32.mxu0 0.0
  %121 = vmatmul.mubr.f32.gmra.mrb[0].mxu0 %v51
  %v122 = vpop.f32.mrb[0].mxu0
  %v123 = vadd.f32 0.0, %v122
  %v124 = vpop.f32.mrb[0].mxu0
  %125 = vdwg.mxu0
  %v126 = vmax.f32 %v123, 0.0
  %v127 = vld [vmem:[%s2] sm:$0x3]
  %vm128 = vcmask 15360
  %v130 = vsel %vm128, %v126, 0
  %vm132 = vcmask 1041408
  %v134 = vsel %vm132, %v127, 0
  %136 = vmatprep.subr.mxu0 0.0
  %137 = vmatpush1.msra.mxu0 %v134
  %138 = vmatprep.subr.mxu0 0.0
  %139 = vmatpush1.msra.mxu0 0.0
  %140 = vmatprep.subr.mxu0 0.0
  %141 = vmatpush1.msra.mxu0 0.0
  %142 = vmatprep.subr.mxu0 0.0
  %143 = vmatpush1.msra.mxu0 0.0
  %144 = vmatprep.subr.mxu0 0.0
  %145 = vmatpush1.msra.mxu0 0.0
  %146 = vmatprep.subr.mxu0 0.0
  %147 = vmatpush1.msra.mxu0 0.0
  %148 = vmatprep.subr.mxu0 0.0
  %149 = vmatpush1.msra.mxu0 0.0
  %150 = vmatprep.subr.mxu0 0.0
  %151 = vmatpush1.msra.mxu0 0.0
  %152 = vmatprep.subr.mxu0 0.0
  %153 = vmatpush1.msra.mxu0 0.0
  %154 = vmatprep.subr.mxu0 0.0
  %155 = vmatpush1.msra.mxu0 0.0
  %156 = vmatprep.subr.mxu0 0.0
  %157 = vmatpush1.msra.mxu0 0.0
  %158 = vmatprep.subr.mxu0 0.0
  %159 = vmatpush1.msra.mxu0 0.0
  %160 = vmatprep.subr.mxu0 0.0
  %161 = vmatpush1.msra.mxu0 0.0
  %162 = vmatprep.subr.mxu0 0.0
  %163 = vmatpush1.msra.mxu0 0.0
  %164 = vmatprep.subr.mxu0 0.0
  %165 = vmatpush1.msra.mxu0 0.0
  %166 = vmatprep.subr.mxu0 0.0
  %167 = vmatpush1.msra.mxu0 0.0
  %168 = vmatprep.subr.mxu0 0.0
  %169 = vmatpush1.msra.mxu0 0.0
  %170 = vmatprep.subr.mxu0 0.0
  %171 = vmatpush1.msra.mxu0 0.0
  %172 = vmatprep.subr.mxu0 0.0
  %173 = vmatpush1.msra.mxu0 0.0
  %174 = vmatprep.subr.mxu0 0.0
  %175 = vmatpush1.msra.mxu0 0.0
  %176 = vmatprep.subr.mxu0 0.0
  %177 = vmatpush1.msra.mxu0 0.0
  %178 = vmatprep.subr.mxu0 0.0
  %179 = vmatpush1.msra.mxu0 0.0
  %180 = vmatprep.subr.mxu0 0.0
  %181 = vmatpush1.msra.mxu0 0.0
  %182 = vmatprep.subr.mxu0 0.0
  %183 = vmatpush1.msra.mxu0 0.0
  %184 = vmatprep.subr.mxu0 0.0
  %185 = vmatpush1.msra.mxu0 0.0
  %186 = vmatprep.subr.mxu0 0.0
  %187 = vmatpush1.msra.mxu0 0.0
  %188 = vmatprep.subr.mxu0 0.0
  %189 = vmatpush1.msra.mxu0 0.0
  %190 = vmatprep.subr.mxu0 0.0
  %191 = vmatpush1.msra.mxu0 0.0
  %192 = vmatprep.subr.mxu0 0.0
  %193 = vmatpush1.msra.mxu0 0.0
  %194 = vmatprep.subr.mxu0 0.0
  %195 = vmatpush1.msra.mxu0 0.0
  %196 = vmatprep.subr.mxu0 0.0
  %197 = vmatpush1.msra.mxu0 0.0
  %198 = vmatprep.subr.mxu0 0.0
  %199 = vmatpush1.msra.mxu0 0.0
  %200 = vmatprep.mubr.f32.mxu0 0.0
  %201 = vmatmul.mubr.f32.gmra.mrb[0].mxu0 %v130
  %v202 = vpop.f32.mrb[0].mxu0
  %v203 = vadd.f32 0.0, %v202
  %v204 = vpop.f32.mrb[0].mxu0
  %205 = vdwg.mxu0
  %v206 = vxor.u32 %v203, 2147483648
  %v207 = vmul.f32 %v206, 1.442695
  %v208 = vpow.pop %v207
  %v209 = vadd.f32 %v208, 1.0
  %v210 = vrcp.pop %v209
  %v211 = vmul.f32 1.0, %v210
  %v212 = vlaneseq
  %v213 = vshrl.u32 %v212, 7
  %v214 = vsub.s32 0, %v213
  %v215 = vrot.slane %v211, %v214
  %217 = vbcast.lane.b32.xlu0 %v215, 256
  %v218 = vpop.permute.xlu0 %217
  %v219 = vlaneseq
  %v220 = vshrl.u32 %v219, 7
  %v221 = vsub.s32 1, %v220
  %v222 = vrot.slane %v211, %v221
  %224 = vbcast.lane.b32.xlu0 %v222, 256
  %v225 = vpop.permute.xlu0 %224
  %v229 = vunpack.c.l.s4 839922192
  %v230 = vunpack.c.0.s8 %v229
  %v231 = vlaneseq
  %v232 = vshrl.u32 %v231, 7
  %v233 = vsub.s32 %v230, %v232
  %v234 = vrot.slane %v218, %v233
  %v236 = vunpack.c.l.s4 839922192
  %v237 = vunpack.c.0.s8 %v236
  %v238 = vlaneseq
  %v239 = vshrl.u32 %v238, 7
  %v240 = vsub.s32 %v237, %v239
  %v241 = vrot.slane %v225, %v240
  %v244 = vmul.f32 %v14, %v234
  %v245 = vmul.f32 %v15, %v241
  %246 = vst [vmem:[%s3] sm:$0xff] %v244
  %247 = vst [vmem:[%s3 + $0x8] sm:$0xff] %v245
  // Predicated region
  $region14: #{se_module_pallas.1} parent=0 // pred_check
    _
  $region15: #{se_module_pallas.1} parent=0 // pred_check_branch
    %249 = sbr.rel (0) target = $region17
  $region16: #{se_module_pallas.1} parent=0 // pred_region
    _
  $region17: #{se_module_pallas.1} parent=0 // pred_fallthru
    _
  // Predicated region
  $region18: #{se_module_pallas.1} parent=0 // pred_check
    _
  $region19: #{se_module_pallas.1} parent=0 // pred_check_branch
    %251 = sbr.rel (0) target = $region21
  $region20: #{se_module_pallas.1} parent=0 // pred_region
    _
  $region21: #{se_module_pallas.1} parent=0 // pred_fallthru
    _

</llo_original>
